<compile_context>
chip_gen: v6e
topology: v6e:2x2x1
jax: 0.10.0
libtpu: 0.0.40
codegen_flags: <defaults>
</compile_context>

<pallas_src>
import functools
import math

import jax
import jax.numpy as jnp
from jax import lax
from jax.experimental import pallas as pl
from jax.experimental.pallas import tpu as pltpu

EPS = 1e-5


def _round_up(x, m):
    return ((x + m - 1) // m) * m


def _vmem_capacity_bytes():
    try:
        info = pltpu.get_tpu_info()
        cap = getattr(info, "vmem_capacity_bytes", None)
        if cap:
            return int(cap)
    except Exception:
        pass
    return 64 << 20  # conservative fallback (v7x TensorCore VMEM)


# ----------------------------- fused fast path ------------------------------

def _fused_kernel(x_ref, g_ref, b_ref, o_ref, *, n_rows):
    x = x_ref[...].astype(jnp.float32)
    inv_n = 1.0 / n_rows
    mean = jnp.sum(x, axis=0, keepdims=True) * inv_n
    xc = x - mean
    var = jnp.sum(xc * xc, axis=0, keepdims=True) * inv_n  # centered (accurate) variance
    inv_std = lax.rsqrt(var + EPS)
    scale = g_ref[...].astype(jnp.float32) * inv_std
    o_ref[...] = (xc * scale + b_ref[...].astype(jnp.float32)).astype(o_ref.dtype)


def _fused_path(x2d, gamma, beta, vmem_limit):
    N, D = x2d.shape
    g = gamma.astype(jnp.float32).reshape(1, D)
    b = beta.astype(jnp.float32).reshape(1, D)
    # No grid: single invocation, whole arrays resident in VMEM.
    return pl.pallas_call(
        functools.partial(_fused_kernel, n_rows=N),
        out_shape=jax.ShapeDtypeStruct((N, D), x2d.dtype),
        compiler_params=pltpu.CompilerParams(vmem_limit_bytes=vmem_limit),
    )(x2d, g, b)


# ---------------------------- two-pass tiled path ----------------------------

def _stats_kernel(x_ref, sum_ref, sq_ref, *, valid_rows, tile_rows):
    """Pass 1: accumulate per-lane sum and sum-of-squares over row tiles."""
    c = pl.program_id(0)
    i = pl.program_id(1)
    steps_per_slice = pl.num_programs(1)

    @pl.when(i == 0)
    def _init():
        sum_ref[...] = jnp.zeros_like(sum_ref)
        sq_ref[...] = jnp.zeros_like(sq_ref)

    x = x_ref[...].astype(jnp.float32)
    row0 = (c * steps_per_slice + i) * tile_rows
    rows = row0 + lax.broadcasted_iota(jnp.int32, x.shape, 0)
    x = jnp.where(rows < valid_rows, x, 0.0)  # mask tail / out-of-range rows
    sum_ref[...] += jnp.sum(x, axis=0, keepdims=True)[None]
    sq_ref[...] += jnp.sum(x * x, axis=0, keepdims=True)[None]


def _normalize_kernel(x_ref, scale_ref, shift_ref, o_ref):
    """Pass 2: y = x * scale + shift (single multiply-add per element)."""
    x = x_ref[...].astype(jnp.float32)
    o_ref[...] = (x * scale_ref[...] + shift_ref[...]).astype(o_ref.dtype)


def _two_pass_path(x2d, gamma, beta, vmem_cap):
    N, D = x2d.shape

    # Lane packing: fold k rows into lanes so the last dim is a multiple of 128.
    # Applied only when N % k == 0 so no pad / slice copy is ever needed.
    k = 128 // math.gcd(D, 128)
    if k > 1 and N % k != 0:
        k = 1
    Dp = k * D
    Np = N // k
    x_packed = x2d.reshape(Np, Dp)  # contiguous reshape: no data movement

    itemsize = x2d.dtype.itemsize
    vmem_limit = min(vmem_cap // 2, 48 << 20)   # ~32 MiB on v7x, 48 MiB on v5e/v6e
    tile_budget = vmem_limit // 2

    def tile_rows_for(bytes_per_row):
        rows = max(8, (tile_budget // max(bytes_per_row, 1)) // 8 * 8)
        return min(rows, _round_up(Np, 8))

    # Pass 1 double-buffers only the input; pass 2 double-buffers input + output.
    rows1 = tile_rows_for(2 * Dp * itemsize)
    rows2 = tile_rows_for(2 * Dp * (itemsize + itemsize))

    steps1 = pl.cdiv(Np, rows1)
    nsplit = 2 if steps1 >= 2 else 1  # shard reduction across both TCs on v7x
    steps_per_slice = pl.cdiv(steps1, nsplit)

    psum, psq = pl.pallas_call(
        functools.partial(_stats_kernel, valid_rows=Np, tile_rows=rows1),
        out_shape=(jax.ShapeDtypeStruct((nsplit, 1, Dp), jnp.float32),
                   jax.ShapeDtypeStruct((nsplit, 1, Dp), jnp.float32)),
        grid=(nsplit, steps_per_slice),
        in_specs=[pl.BlockSpec((rows1, Dp),
                               lambda c, i: (c * steps_per_slice + i, 0))],
        out_specs=(pl.BlockSpec((1, 1, Dp), lambda c, i: (c, 0, 0)),
                   pl.BlockSpec((1, 1, Dp), lambda c, i: (c, 0, 0))),
        compiler_params=pltpu.CompilerParams(
            dimension_semantics=("parallel", "arbitrary"),
            vmem_limit_bytes=vmem_limit),
    )(x_packed)

    # Fold core-split and lane-packed partials, build per-feature scale / shift.
    # (tiny (D,)-sized math, done once between the two passes)
    sums = psum.reshape(nsplit * k, D).sum(axis=0)
    sqs = psq.reshape(nsplit * k, D).sum(axis=0)
    mean = sums / N
    # TODO(synk): E[x^2]-mean^2 loses precision if |mean| >> std; a Welford /
    # per-tile-centered accumulation would match PyTorch more tightly there.
    var = jnp.maximum(sqs / N - mean * mean, 0.0)  # biased variance
    inv_std = lax.rsqrt(var + EPS)
    scale = gamma.astype(jnp.float32).reshape(D) * inv_std
    shift = beta.astype(jnp.float32).reshape(D) - mean * scale
    scale_p = jnp.tile(scale, k).reshape(1, Dp)
    shift_p = jnp.tile(shift, k).reshape(1, Dp)

    steps2 = pl.cdiv(Np, rows2)
    out_packed = pl.pallas_call(
        _normalize_kernel,
        out_shape=jax.ShapeDtypeStruct((Np, Dp), x2d.dtype),  # un-padded: OOB writes dropped
        grid=(steps2,),
        in_specs=[pl.BlockSpec((rows2, Dp), lambda i: (i, 0)),
                  pl.BlockSpec((1, Dp), lambda i: (0, 0)),
                  pl.BlockSpec((1, Dp), lambda i: (0, 0))],
        out_specs=pl.BlockSpec((rows2, Dp), lambda i: (i, 0)),
        compiler_params=pltpu.CompilerParams(
            dimension_semantics=("parallel",),
            vmem_limit_bytes=vmem_limit),
    )(x_packed, scale_p, shift_p)

    return out_packed.reshape(N, D)


# --------------------------------- wrapper -----------------------------------

def normalization_batch(x, gamma, beta):
    """Forward of Normalization(embed_dim, 'batch'): training-mode BatchNorm1d
    over the flattened leading dims, affine, eps=1e-5."""
    orig_shape = x.shape
    D = orig_shape[-1]
    x2d = x.reshape(-1, D)
    N = x2d.shape[0]

    vmem_cap = _vmem_capacity_bytes()
    itemsize = x2d.dtype.itemsize
    # in + out buffers + ~3 f32 temporaries must fit comfortably in VMEM.
    fused_need = N * D * (2 * itemsize + 12)
    fused_cap = (vmem_cap * 3) // 8          # ~24 MiB on v7x, ~48 MiB on v5e/v6e
    if fused_need <= fused_cap:
        fused_limit = min(fused_cap + (8 << 20), vmem_cap - (8 << 20))
        out2d = _fused_path(x2d, gamma, beta, fused_limit)
    else:
        out2d = _two_pass_path(x2d, gamma, beta, vmem_cap)
    return out2d.reshape(orig_shape)


if __name__ == "__main__":
    key = jax.random.PRNGKey(0)
    kx, kg, kb, kx2, kx3 = jax.random.split(key, 5)

    # Shapes consistent with the module's usage: (batch, seq_len, embed_dim)
    B, S, D = 2, 8, 32
    x = jax.random.normal(kx, (B, S, D), dtype=jnp.float32)
    stdv = 1.0 / math.sqrt(D)
    gamma = jax.random.uniform(kg, (D,), minval=-stdv, maxval=stdv, dtype=jnp.float32)
    beta = jax.random.uniform(kb, (D,), minval=-stdv, maxval=stdv, dtype=jnp.float32)

    def ref_bn(xi, g, b):
        d = xi.shape[-1]
        x2 = xi.reshape(-1, d)
        mean = jnp.mean(x2, axis=0, keepdims=True)
        var = jnp.mean((x2 - mean) ** 2, axis=0, keepdims=True)
        return ((x2 - mean) / jnp.sqrt(var + EPS) * g + b).reshape(xi.shape)

    fn = jax.jit(normalization_batch)
    out = jax.block_until_ready(fn(x, gamma, beta))
    assert jnp.allclose(out, ref_bn(x, gamma, beta), atol=2e-4, rtol=2e-4), \
        "fused path mismatch vs reference"

    # Exercise the tiled two-pass path explicitly (packed and unpacked layouts).
    two_pass = jax.jit(lambda a, g, b: _two_pass_path(a, g, b, _vmem_capacity_bytes()))

    xa = jax.random.normal(kx2, (64, 96), dtype=jnp.float32)      # k=4 lane packing
    ga = jnp.full((96,), 0.7, jnp.float32)
    ba = jnp.full((96,), 0.1, jnp.float32)
    oa = jax.block_until_ready(two_pass(xa, ga, ba))
    assert jnp.allclose(oa, ref_bn(xa, ga, ba), atol=2e-4, rtol=2e-4), \
        "two-pass (packed) mismatch vs reference"

    xb = jax.random.normal(kx3, (21, 32), dtype=jnp.float32)      # unaligned N, k=1
    gb = jnp.full((32,), 1.3, jnp.float32)
    bb = jnp.full((32,), -0.2, jnp.float32)
    ob = jax.block_until_ready(two_pass(xb, gb, bb))
    assert jnp.allclose(ob, ref_bn(xb, gb, bb), atol=2e-4, rtol=2e-4), \
        "two-pass (masked tail) mismatch vs reference"

    # TODO(synk): running_mean/running_var buffer updates (eval-mode BatchNorm)
    # and the normalization='instance' branch are not modeled; forward matches
    # training-mode BatchNorm1d exactly.
    print("KERNEL_OK")
</pallas_src>

<mosaic_0001>
module attributes {stable_mosaic.version = 11 : i64} {
  func.func @_fused_kernel(%arg0: memref<16x32xf32, #tpu.memory_space<vmem>>, %arg1: memref<1x32xf32, #tpu.memory_space<vmem>>, %arg2: memref<1x32xf32, #tpu.memory_space<vmem>>, %arg3: memref<16x32xf32, #tpu.memory_space<vmem>>) attributes {dimension_semantics = [], scalar_prefetch = 0 : i64, scratch_operands = 0 : i64, tpu.core_type = #tpu.core_type<tc>} {
    %c0 = arith.constant 0 : index
    %c0_0 = arith.constant 0 : index
    %0 = vector.load %arg0[%c0, %c0_0] : memref<16x32xf32, #tpu.memory_space<vmem>>, vector<16x32xf32>
    %cst = arith.constant dense<0.000000e+00> : vector<32xf32>
    %1 = vector.multi_reduction <add>, %0, %cst [0] : vector<16x32xf32> to vector<32xf32>
    %2 = vector.shape_cast %1 : vector<32xf32> to vector<1x32xf32>
    %cst_1 = arith.constant 6.250000e-02 : f32
    %3 = vector.broadcast %cst_1 : f32 to vector<1x32xf32>
    %4 = arith.mulf %2, %3 : vector<1x32xf32>
    %5 = vector.broadcast %4 : vector<1x32xf32> to vector<16x32xf32>
    %6 = arith.subf %0, %5 : vector<16x32xf32>
    %7 = arith.mulf %6, %6 : vector<16x32xf32>
    %cst_2 = arith.constant dense<0.000000e+00> : vector<32xf32>
    %8 = vector.multi_reduction <add>, %7, %cst_2 [0] : vector<16x32xf32> to vector<32xf32>
    %9 = vector.shape_cast %8 : vector<32xf32> to vector<1x32xf32>
    %cst_3 = arith.constant 6.250000e-02 : f32
    %10 = vector.broadcast %cst_3 : f32 to vector<1x32xf32>
    %11 = arith.mulf %9, %10 : vector<1x32xf32>
    %cst_4 = arith.constant 9.99999974E-6 : f32
    %12 = vector.broadcast %cst_4 : f32 to vector<1x32xf32>
    %13 = arith.addf %11, %12 : vector<1x32xf32>
    %14 = math.rsqrt %13 : vector<1x32xf32>
    %c0_5 = arith.constant 0 : index
    %c0_6 = arith.constant 0 : index
    %15 = vector.load %arg1[%c0_5, %c0_6] : memref<1x32xf32, #tpu.memory_space<vmem>>, vector<1x32xf32>
    %16 = arith.mulf %15, %14 : vector<1x32xf32>
    %17 = vector.broadcast %16 : vector<1x32xf32> to vector<16x32xf32>
    %18 = arith.mulf %6, %17 : vector<16x32xf32>
    %c0_7 = arith.constant 0 : index
    %c0_8 = arith.constant 0 : index
    %19 = vector.load %arg2[%c0_7, %c0_8] : memref<1x32xf32, #tpu.memory_space<vmem>>, vector<1x32xf32>
    %20 = vector.broadcast %19 : vector<1x32xf32> to vector<16x32xf32>
    %21 = arith.addf %18, %20 : vector<16x32xf32>
    %c0_9 = arith.constant 0 : index
    %c0_10 = arith.constant 0 : index
    %22 = vector.load %arg3[%c0_9, %c0_10] : memref<16x32xf32, #tpu.memory_space<vmem>>, vector<16x32xf32>
    tpu.vector_store %arg3[%c0_9, %c0_10], %21 {strides = array<i32>} : memref<16x32xf32, #tpu.memory_space<vmem>>, vector<16x32xf32>,
    return
  }
}

</mosaic_0001>

<llo_original>
// kernel: normalization_batch.1
$region0: #{normalization_batch.1}
  #allocation0 [shape = 'u32[]', space=smem, size = 0x4, offset = 0x4, fixed_abs, tag = 'smem constant byte address 0x4 - core index']
  #allocation1 [shape = 'u32[144,128]{1,0:T(1,128)}', space=vmem, size = 0x12000, scoped, tag = 'internal scratch']
  %s0 = inlined_call_operand.hbm [shape: f32[16,32], index: 0, kind: input, shape index: {}]
  %s1 = inlined_call_operand.vmem [shape: f32[1,32], index: 1, kind: input, shape index: {}]
  %s2 = inlined_call_operand.vmem [shape: f32[1,32], index: 2, kind: input, shape index: {}]
  %s3 = inlined_call_operand.hbm [shape: f32[16,32], index: 3, kind: output, shape index: {}]
  %s4 = sld [smem:[#allocation0]]
  $region26: #{normalization_batch.1} parent=0
    _
  %s6 = ssub.s32 1, %s4
  %s7 = scalar_select 0, %s6, %s4
  $region1: #{normalization_batch.1} parent=0
    #allocation2 [shape = 'u8[8192]{0}', space=vmem, size = 0x2000, scoped, tag = 'input window, operand 0, single buffered']
    #allocation3 [shape = 's32[1]{0}', space=sflag, size = 0x4, scoped, tag = 'scoped memory for normalization_batch.1']
    #allocation4 [shape = 's32[1]{0}', space=sflag, size = 0x4, scoped, tag = 'scoped memory for normalization_batch.1']
    #allocation5 [shape = 'u8[8192]{0}', space=vmem, size = 0x2000, scoped, tag = 'output window, operand 0, single buffered']
    %8 = vsyncpa [#allocation3], 0
    %9 = vsyncpa [#allocation4], 0
    // Predicated region
    $region2: #{normalization_batch.1} parent=1 // pred_check
      _
    $region3: #{normalization_batch.1} parent=1 // pred_check_branch
      %11 = sbr.rel (0) target = $region5
    $region4: #{normalization_batch.1} parent=1 // pred_region
      %s13 = ssub.s32 256, 256
      %14 = vsyncadd [#allocation3], %s13
      %s15 = sshll.u32 [#allocation2], 4
      %s16 = int_to_ptr.vmem [resolvable:$true] %s15
      %21 = dma.hbm_to_vmem [thread:$0]  %s0, 256, %s16, [#allocation3], 128, 128, 8
    $region5: #{normalization_batch.1} parent=1 // pred_fallthru
      _
    // Predicated region
    $region6: #{normalization_batch.1} parent=1 // pred_check
      _
    $region7: #{normalization_batch.1} parent=1 // pred_check_branch
      %23 = sbr.rel (0) target = $region9
    $region8: #{normalization_batch.1} parent=1 // pred_region
      _
    $region9: #{normalization_batch.1} parent=1 // pred_fallthru
      _
    // Predicated region
    $region10: #{normalization_batch.1} parent=1 // pred_check
      _
    $region11: #{normalization_batch.1} parent=1 // pred_check_branch
      %25 = sbr.rel (0) target = $region13
    $region12: #{normalization_batch.1} parent=1 // pred_region
      _
    $region13: #{normalization_batch.1} parent=1 // pred_fallthru
      _
    // Predicated region
    $region14: #{normalization_batch.1} parent=1 // pred_check
      _
    $region15: #{normalization_batch.1} parent=1 // pred_check_branch
      %27 = sbr.rel (0) target = $region17
    $region16: #{normalization_batch.1} parent=1 // pred_region
      %28 = dma.done [#allocation3], 256
    $region17: #{normalization_batch.1} parent=1 // pred_fallthru
      _
    %v29 = vld [vmem:[#allocation2] sm:$0xff]
    %v30 = vld [vmem:[#allocation2 + $0x8] sm:$0xff]
    %vm31 = vcmask 261120
    %v32 = vsel %vm31, %v29, 0.0
    %v33 = vsel %vm31, %v30, 0.0
    %v34 = vadd.f32 %v32, %v33
    %v35 = vrot.slane %v34, 4
    %v36 = vadd.f32 %v34, %v35
    %v37 = vrot.slane %v36, 2
    %v38 = vadd.f32 %v36, %v37
    %v39 = vrot.slane %v38, 1
    %v40 = vadd.f32 %v38, %v39
    %v41 = vmul.f32 %v40, 0.0625
    %v42 = vsub.f32 %v29, %v41
    %v43 = vsub.f32 %v30, %v41
    %v44 = vmul.f32 %v42, %v42
    %v45 = vmul.f32 %v43, %v43
    %v46 = vsel %vm31, %v44, 0.0
    %v47 = vsel %vm31, %v45, 0.0
    %v48 = vadd.f32 %v46, %v47
    %v49 = vrot.slane %v48, 4
    %v50 = vadd.f32 %v48, %v49
    %v51 = vrot.slane %v50, 2
    %v52 = vadd.f32 %v50, %v51
    %v53 = vrot.slane %v52, 1
    %v54 = vadd.f32 %v52, %v53
    %v55 = vmul.f32 %v54, 0.0625
    %v56 = vadd.f32 %v55, 1e-05
    %v57 = vrsqrt.pop %v56
    %v58 = vld [vmem:[%s1] sm:$0x1]
    %v59 = vmul.f32 %v58, %v57
    %v61 = vlaneseq
    %v62 = vshrl.u32 %v61, 7
    %v63 = vsub.s32 0, %v62
    %v64 = vrot.slane %v59, %v63
    %v66 = vmul.f32 %v42, %v64
    %v67 = vmul.f32 %v43, %v64
    %v68 = vld [vmem:[%s2] sm:$0x1]
    %v70 = vlaneseq
    %v71 = vshrl.u32 %v70, 7
    %v72 = vsub.s32 0, %v71
    %v73 = vrot.slane %v68, %v72
    %v75 = vadd.f32 %v66, %v73
    %v76 = vadd.f32 %v67, %v73
    %77 = vst.msk [vmem:[#allocation5] sm:$0xff] %vm31, %v75
    %78 = vst.msk [vmem:[#allocation5 + $0x8] sm:$0xff] %vm31, %v76
    // Predicated region
    $region18: #{normalization_batch.1} parent=1 // pred_check
      _
    $region19: #{normalization_batch.1} parent=1 // pred_check_branch
      %80 = sbr.rel (0) target = $region21
    $region20: #{normalization_batch.1} parent=1 // pred_region
      %s82 = ssub.s32 256, 256
      %83 = vsyncadd [#allocation4], %s82
      %s84 = sshll.u32 [#allocation5], 4
      %s85 = int_to_ptr.vmem [resolvable:$true] %s84
      %90 = dma.vmem_to_hbm [thread:$0]  %s85, 256, %s3, [#allocation4], 128, 128, 8
    $region21: #{normalization_batch.1} parent=1 // pred_fallthru
      _
    // Predicated region
    $region22: #{normalization_batch.1} parent=1 // pred_check
      _
    $region23: #{normalization_batch.1} parent=1 // pred_check_branch
      %92 = sbr.rel (0) target = $region25
    $region24: #{normalization_batch.1} parent=1 // pred_region
      %93 = dma.done [#allocation4], 256
    $region25: #{normalization_batch.1} parent=1 // pred_fallthru
      _
    %94 = vsyncpa [#allocation3], 1
    %95 = vsyncpa [#allocation4], 1

</llo_original>
